<compile_context>
chip_gen: v6e
topology: v6e:2x2x1
jax: 0.10.0
libtpu: 0.0.40
codegen_flags: <defaults>
</compile_context>

<pallas_src>
import jax
import jax.numpy as jnp
from jax.experimental import pallas as pl
from jax.experimental.pallas import tpu as pltpu

# Padded, lane-aligned dimensions used inside the kernel.
K_PAD = 1024   # in_features 1000 -> 1024 (multiple of 128)
H1_PAD = 128   # fc1 out      64  -> 128
H2_PAD = 128   # fc2 out      32  -> 128


def _round_up(n, m):
    return ((n + m - 1) // m) * m


def mlp_kernel(x_ref, w1_ref, b1_ref, w2_ref, b2_ref, w3t_ref, b3_ref, o_ref):
    # fc1 + ReLU: bf16 MXU matmul, f32 accumulation.
    h1 = jnp.dot(x_ref[...], w1_ref[...], preferred_element_type=jnp.float32)
    h1 = jnp.maximum(h1 + b1_ref[...], 0.0)
    # fc2 + ReLU.
    h2 = jnp.dot(h1.astype(jnp.bfloat16), w2_ref[...],
                 preferred_element_type=jnp.float32)
    h2 = jnp.maximum(h2 + b2_ref[...], 0.0)
    # fc3 (N=1): VPU multiply + cross-lane reduce instead of a 128x1 MXU matmul.
    h3 = jnp.sum(h2 * w3t_ref[...], axis=-1, keepdims=True)
    o_ref[...] = (h3 + b3_ref[...]).astype(o_ref.dtype)


def pack_params(params):
    """Zero-pad weights to lane-aligned shapes; cast big matmul operands to bf16."""
    w1, b1, w2, b2, w3, b3 = params
    # (1000, 64) -> (1024, 128) bf16.
    w1p = jnp.zeros((K_PAD, H1_PAD), jnp.bfloat16).at[:1000, :64].set(
        w1.astype(jnp.bfloat16))
    b1p = jnp.zeros((1, H1_PAD), jnp.float32).at[:, :64].set(b1)
    # (64, 32) -> (128, 128) bf16.
    w2p = jnp.zeros((H1_PAD, H2_PAD), jnp.bfloat16).at[:64, :32].set(
        w2.astype(jnp.bfloat16))
    b2p = jnp.zeros((1, H2_PAD), jnp.float32).at[:, :32].set(b2)
    # (32, 1) -> stored transposed as (1, 128) f32 (tiny; consumed on the VPU).
    w3tp = jnp.zeros((1, H2_PAD), jnp.float32).at[:, :32].set(w3[:, 0][None, :])
    b3p = b3.reshape(1, 1).astype(jnp.float32)
    return w1p, b1p, w2p, b2p, w3tp, b3p


def net_forward(x, params, *, tile_b=1024):
    """x: (B, 1000) float32 -> (B, 1) float32, same math as Net.forward."""
    w1p, b1p, w2p, b2p, w3tp, b3p = pack_params(params)
    B = x.shape[0]

    # Batch tile: multiple of 8, clamped so tiny batches still produce a valid grid.
    tile_b = min(tile_b, _round_up(B, 8))
    b_pad = _round_up(B, tile_b)
    grid = (b_pad // tile_b,)

    # Pad x to (b_pad, K_PAD) and cast to bf16 (halves dominant HBM traffic).
    xp = jnp.zeros((b_pad, K_PAD), jnp.bfloat16).at[:B, :1000].set(
        x.astype(jnp.bfloat16))

    out = pl.pallas_call(
        mlp_kernel,
        out_shape=jax.ShapeDtypeStruct((b_pad, 1), jnp.float32),
        grid=grid,
        in_specs=[
            pl.BlockSpec((tile_b, K_PAD), lambda i: (i, 0)),    # x: batch-tiled
            pl.BlockSpec((K_PAD, H1_PAD), lambda i: (0, 0)),    # W1: VMEM-resident
            pl.BlockSpec((1, H1_PAD), lambda i: (0, 0)),        # b1
            pl.BlockSpec((H1_PAD, H2_PAD), lambda i: (0, 0)),   # W2
            pl.BlockSpec((1, H2_PAD), lambda i: (0, 0)),        # b2
            pl.BlockSpec((1, H2_PAD), lambda i: (0, 0)),        # W3^T
            pl.BlockSpec((1, 1), lambda i: (0, 0)),             # b3
        ],
        out_specs=pl.BlockSpec((tile_b, 1), lambda i: (i, 0)),
        compiler_params=pltpu.CompilerParams(
            dimension_semantics=("parallel",)),
    )(xp, w1p, b1p, w2p, b2p, w3tp, b3p)
    return out[:B]


def init_linear(key, fan_in, fan_out):
    """Deterministic init mimicking torch.nn.Linear default (uniform +-1/sqrt(fan_in))."""
    k_w, k_b = jax.random.split(key)
    bound = 1.0 / jnp.sqrt(float(fan_in))
    # stored as (in, out) so the kernel computes x @ W (== PyTorch x @ W.T + b)
    w = jax.random.uniform(k_w, (fan_in, fan_out), jnp.float32, -bound, bound)
    b = jax.random.uniform(k_b, (1, fan_out), jnp.float32, -bound, bound)
    return w, b


if __name__ == "__main__":
    key = jax.random.PRNGKey(0)
    k_x, k1, k2, k3 = jax.random.split(key, 4)

    B = 8  # small example batch
    x = jax.random.normal(k_x, (B, 1000), jnp.float32)

    w1, b1 = init_linear(k1, 1000, 64)
    w2, b2 = init_linear(k2, 64, 32)
    w3, b3 = init_linear(k3, 32, 1)
    params = (w1, b1, w2, b2, w3, b3)

    out = jax.block_until_ready(net_forward(x, params))

    # Reference using the same bf16 quantization of x/W1/W2 with f32 accumulation.
    xb = x.astype(jnp.bfloat16).astype(jnp.float32)
    w1b = w1.astype(jnp.bfloat16).astype(jnp.float32)
    w2b = w2.astype(jnp.bfloat16).astype(jnp.float32)
    ref = jnp.maximum(xb @ w1b + b1, 0.0)
    ref = jnp.maximum(ref @ w2b + b2, 0.0)
    ref = ref @ w3 + b3

    assert out.shape == (B, 1)
    assert jnp.allclose(out, ref, atol=1e-3, rtol=1e-3), (
        float(jnp.max(jnp.abs(out - ref))))

    print("KERNEL_OK")
</pallas_src>

<mosaic_0001>
module attributes {stable_mosaic.version = 11 : i64} {
  func.func @mlp_kernel(%arg0: i32, %arg1: memref<8x1024xbf16, #tpu.memory_space<vmem>>, %arg2: memref<1024x128xbf16, #tpu.memory_space<vmem>>, %arg3: memref<1x128xf32, #tpu.memory_space<vmem>>, %arg4: memref<128x128xbf16, #tpu.memory_space<vmem>>, %arg5: memref<1x128xf32, #tpu.memory_space<vmem>>, %arg6: memref<1x128xf32, #tpu.memory_space<vmem>>, %arg7: memref<1x1xf32, #tpu.memory_space<vmem>>, %arg8: memref<8x1xf32, #tpu.memory_space<vmem>>) attributes {dimension_semantics = [#tpu.dimension_semantics<parallel>], iteration_bounds = array<i64: 1>, scalar_prefetch = 0 : i64, scratch_operands = 0 : i64, tpu.core_type = #tpu.core_type<tc>, window_params = [{transform_indices = @transform_0, window_bounds = array<i64: 8, 1024>}, {pipeline_mode = #tpu.pipeline_mode<synchronous>, transform_indices = @transform_1, window_bounds = array<i64: 1024, 128>}, {pipeline_mode = #tpu.pipeline_mode<synchronous>, transform_indices = @transform_2, window_bounds = array<i64: 1, 128>}, {pipeline_mode = #tpu.pipeline_mode<synchronous>, transform_indices = @transform_3, window_bounds = array<i64: 128, 128>}, {pipeline_mode = #tpu.pipeline_mode<synchronous>, transform_indices = @transform_4, window_bounds = array<i64: 1, 128>}, {pipeline_mode = #tpu.pipeline_mode<synchronous>, transform_indices = @transform_5, window_bounds = array<i64: 1, 128>}, {pipeline_mode = #tpu.pipeline_mode<synchronous>, transform_indices = @transform_6, window_bounds = array<i64: 1, 1>}, {transform_indices = @transform_7, window_bounds = array<i64: 8, 1>}]} {
    %c0 = arith.constant 0 : index
    %c0_0 = arith.constant 0 : index
    %0 = vector.load %arg1[%c0, %c0_0] : memref<8x1024xbf16, #tpu.memory_space<vmem>>, vector<8x1024xbf16>
    %c0_1 = arith.constant 0 : index
    %c0_2 = arith.constant 0 : index
    %1 = vector.load %arg2[%c0_1, %c0_2] : memref<1024x128xbf16, #tpu.memory_space<vmem>>, vector<1024x128xbf16>
    %cst = arith.constant dense<0.000000e+00> : vector<8x128xf32>
    %2 = tpu.matmul %0, %1, %cst {dimension_numbers = #tpu.dot_dimension_numbers<[1], [0], [0], [1], [0, 0, 1, 1], [], []>} : vector<8x1024xbf16>, vector<1024x128xbf16>, vector<8x128xf32> -> vector<8x128xf32>
    %c0_3 = arith.constant 0 : index
    %c0_4 = arith.constant 0 : index
    %3 = vector.load %arg3[%c0_3, %c0_4] : memref<1x128xf32, #tpu.memory_space<vmem>>, vector<1x128xf32>
    %4 = vector.broadcast %3 : vector<1x128xf32> to vector<8x128xf32>
    %5 = arith.addf %2, %4 : vector<8x128xf32>
    %cst_5 = arith.constant 0.000000e+00 : f32
    %6 = vector.broadcast %cst_5 : f32 to vector<8x128xf32>
    %7 = arith.maximumf %5, %6 : vector<8x128xf32>
    %8 = arith.truncf %7 : vector<8x128xf32> to vector<8x128xbf16>
    %c0_6 = arith.constant 0 : index
    %c0_7 = arith.constant 0 : index
    %9 = vector.load %arg4[%c0_6, %c0_7] : memref<128x128xbf16, #tpu.memory_space<vmem>>, vector<128x128xbf16>
    %cst_8 = arith.constant dense<0.000000e+00> : vector<8x128xf32>
    %10 = tpu.matmul %8, %9, %cst_8 {dimension_numbers = #tpu.dot_dimension_numbers<[1], [0], [0], [1], [0, 0, 1, 1], [], []>} : vector<8x128xbf16>, vector<128x128xbf16>, vector<8x128xf32> -> vector<8x128xf32>
    %c0_9 = arith.constant 0 : index
    %c0_10 = arith.constant 0 : index
    %11 = vector.load %arg5[%c0_9, %c0_10] : memref<1x128xf32, #tpu.memory_space<vmem>>, vector<1x128xf32>
    %12 = vector.broadcast %11 : vector<1x128xf32> to vector<8x128xf32>
    %13 = arith.addf %10, %12 : vector<8x128xf32>
    %cst_11 = arith.constant 0.000000e+00 : f32
    %14 = vector.broadcast %cst_11 : f32 to vector<8x128xf32>
    %15 = arith.maximumf %13, %14 : vector<8x128xf32>
    %c0_12 = arith.constant 0 : index
    %c0_13 = arith.constant 0 : index
    %16 = vector.load %arg6[%c0_12, %c0_13] : memref<1x128xf32, #tpu.memory_space<vmem>>, vector<1x128xf32>
    %17 = vector.broadcast %16 : vector<1x128xf32> to vector<8x128xf32>
    %18 = arith.mulf %15, %17 : vector<8x128xf32>
    %cst_14 = arith.constant dense<0.000000e+00> : vector<8xf32>
    %19 = vector.multi_reduction <add>, %18, %cst_14 [1] : vector<8x128xf32> to vector<8xf32>
    %20 = vector.shape_cast %19 : vector<8xf32> to vector<8x1xf32>
    %c0_15 = arith.constant 0 : index
    %c0_16 = arith.constant 0 : index
    %21 = vector.load %arg7[%c0_15, %c0_16] : memref<1x1xf32, #tpu.memory_space<vmem>>, vector<1x1xf32>
    %22 = vector.broadcast %21 : vector<1x1xf32> to vector<8x1xf32>
    %23 = arith.addf %20, %22 : vector<8x1xf32>
    %c0_17 = arith.constant 0 : index
    %c0_18 = arith.constant 0 : index
    %24 = vector.load %arg8[%c0_17, %c0_18] : memref<8x1xf32, #tpu.memory_space<vmem>>, vector<8x1xf32>
    tpu.vector_store %arg8[%c0_17, %c0_18], %23 {strides = array<i32>} : memref<8x1xf32, #tpu.memory_space<vmem>>, vector<8x1xf32>,
    return
  }
  func.func @transform_0(%arg0: i32) -> (i32, i32) {
    %c0_i32 = arith.constant 0 : i32
    %c0_i32_0 = arith.constant 0 : i32
    return %arg0, %c0_i32 : i32, i32
  }
  func.func @transform_1(%arg0: i32) -> (i32, i32) {
    %c0_i32 = arith.constant 0 : i32
    %c0_i32_0 = arith.constant 0 : i32
    %c0_i32_1 = arith.constant 0 : i32
    return %c0_i32, %c0_i32_0 : i32, i32
  }
  func.func @transform_2(%arg0: i32) -> (i32, i32) {
    %c0_i32 = arith.constant 0 : i32
    %c0_i32_0 = arith.constant 0 : i32
    %c0_i32_1 = arith.constant 0 : i32
    return %c0_i32, %c0_i32_0 : i32, i32
  }
  func.func @transform_3(%arg0: i32) -> (i32, i32) {
    %c0_i32 = arith.constant 0 : i32
    %c0_i32_0 = arith.constant 0 : i32
    %c0_i32_1 = arith.constant 0 : i32
    return %c0_i32, %c0_i32_0 : i32, i32
  }
  func.func @transform_4(%arg0: i32) -> (i32, i32) {
    %c0_i32 = arith.constant 0 : i32
    %c0_i32_0 = arith.constant 0 : i32
    %c0_i32_1 = arith.constant 0 : i32
    return %c0_i32, %c0_i32_0 : i32, i32
  }
  func.func @transform_5(%arg0: i32) -> (i32, i32) {
    %c0_i32 = arith.constant 0 : i32
    %c0_i32_0 = arith.constant 0 : i32
    %c0_i32_1 = arith.constant 0 : i32
    return %c0_i32, %c0_i32_0 : i32, i32
  }
  func.func @transform_6(%arg0: i32) -> (i32, i32) {
    %c0_i32 = arith.constant 0 : i32
    %c0_i32_0 = arith.constant 0 : i32
    %c0_i32_1 = arith.constant 0 : i32
    return %c0_i32, %c0_i32_0 : i32, i32
  }
  func.func @transform_7(%arg0: i32) -> (i32, i32) {
    %c0_i32 = arith.constant 0 : i32
    %c0_i32_0 = arith.constant 0 : i32
    return %arg0, %c0_i32 : i32, i32
  }
}

</mosaic_0001>

<llo_original>
// kernel: tpu_custom_call.1
$region0: #{tpu_custom_call.1}
  #allocation0 [shape = 'u32[]', space=smem, size = 0x4, offset = 0x4, fixed_abs, tag = 'smem constant byte address 0x4 - core index']
  #allocation1 [shape = 'u32[144,128]{1,0:T(1,128)}', space=vmem, size = 0x12000, scoped, tag = 'internal scratch']
  #allocation2 [shape = 'f32[1,1]{1,0:T(1,128)S(1)}', space=vmem, size = 0x200, scoped, tag = 'scoped memory for tpu_custom_call.1']
  %s0 = inlined_call_operand.hbm [shape: bf16[8,1024], index: 0, kind: input, shape index: {}]
  %s1 = inlined_call_operand.hbm [shape: bf16[1024,128], index: 1, kind: input, shape index: {}]
  %s2 = inlined_call_operand.vmem [shape: f32[1,128], index: 2, kind: input, shape index: {}]
  %s3 = inlined_call_operand.hbm [shape: bf16[128,128], index: 3, kind: input, shape index: {}]
  %s4 = inlined_call_operand.vmem [shape: f32[1,128], index: 4, kind: input, shape index: {}]
  %s5 = inlined_call_operand.vmem [shape: f32[1,128], index: 5, kind: input, shape index: {}]
  %s6 = inlined_call_operand.<no memory space> [shape: f32[1,1], index: 6, kind: input, shape index: {}]
  %s7 = inlined_call_operand.vmem [shape: f32[8,1], index: 7, kind: output, shape index: {}]
  %s8 = sld [smem:[#allocation0]]
  $region50: #{tpu_custom_call.1} parent=0
    _
  %s10 = ssub.s32 1, %s8
  %s11 = scalar_select 0, %s10, %s8
  %v12 = vstv %s6
  %13 = vst [vmem:[#allocation2] sm:$0x1] %v12
  $region1: #{tpu_custom_call.1} parent=0
    #allocation3 [shape = 'u8[16384]{0}', space=vmem, size = 0x4000, scoped, tag = 'input window, operand 0, single buffered']
    #allocation4 [shape = 's32[1]{0}', space=sflag, size = 0x4, scoped, tag = 'scoped memory for tpu_custom_call.1']
    #allocation5 [shape = 'u8[262144]{0}', space=vmem, size = 0x40000, scoped, tag = 'input window, operand 1, single buffered']
    #allocation6 [shape = 's32[1]{0}', space=sflag, size = 0x4, scoped, tag = 'scoped memory for tpu_custom_call.1']
    #allocation7 [shape = 'u8[32768]{0}', space=vmem, size = 0x8000, scoped, tag = 'input window, operand 3, single buffered']
    %14 = vsyncpa [#allocation4], 0
    %15 = vsyncpa [#allocation6], 0
    // Predicated region
    $region2: #{tpu_custom_call.1} parent=1 // pred_check
      _
    $region3: #{tpu_custom_call.1} parent=1 // pred_check_branch
      %17 = sbr.rel (0) target = $region5
    $region4: #{tpu_custom_call.1} parent=1 // pred_region
      %s19 = ssub.s32 512, 512
      %20 = vsyncadd [#allocation4], %s19
      %s22 = sshll.u32 [#allocation3], 4
      %s23 = int_to_ptr.vmem [resolvable:$true] %s22
      %25 = dma.hbm_to_vmem [thread:$0]  %s0, 512, %s23, [#allocation4]
    $region5: #{tpu_custom_call.1} parent=1 // pred_fallthru
      _
    // Predicated region
    $region6: #{tpu_custom_call.1} parent=1 // pred_check
      _
    $region7: #{tpu_custom_call.1} parent=1 // pred_check_branch
      %27 = sbr.rel (0) target = $region9
    $region8: #{tpu_custom_call.1} parent=1 // pred_region
      %s29 = ssub.s32 8192, 8192
      %30 = vsyncadd [#allocation6], %s29
      %s31 = sshll.u32 [#allocation5], 4
      %s32 = int_to_ptr.vmem [resolvable:$true] %s31
      %37 = dma.hbm_to_vmem [thread:$0]  %s1, 8192, %s32, [#allocation6], 64, 64, 4
    $region9: #{tpu_custom_call.1} parent=1 // pred_fallthru
      _
    // Predicated region
    $region10: #{tpu_custom_call.1} parent=1 // pred_check
      _
    $region11: #{tpu_custom_call.1} parent=1 // pred_check_branch
      %39 = sbr.rel (0) target = $region13
    $region12: #{tpu_custom_call.1} parent=1 // pred_region
      _
    $region13: #{tpu_custom_call.1} parent=1 // pred_fallthru
      _
    // Predicated region
    $region14: #{tpu_custom_call.1} parent=1 // pred_check
      _
    $region15: #{tpu_custom_call.1} parent=1 // pred_check_branch
      %41 = sbr.rel (0) target = $region17
    $region16: #{tpu_custom_call.1} parent=1 // pred_region
      %s43 = ssub.s32 1024, 1024
      %44 = vsyncadd [#allocation6], %s43
      %s45 = sshll.u32 [#allocation7], 4
      %s46 = int_to_ptr.vmem [resolvable:$true] %s45
      %51 = dma.hbm_to_vmem [thread:$0]  %s3, 1024, %s46, [#allocation6], 64, 64, 4
    $region17: #{tpu_custom_call.1} parent=1 // pred_fallthru
      _
    // Predicated region
    $region18: #{tpu_custom_call.1} parent=1 // pred_check
      _
    $region19: #{tpu_custom_call.1} parent=1 // pred_check_branch
      %53 = sbr.rel (0) target = $region21
    $region20: #{tpu_custom_call.1} parent=1 // pred_region
      _
    $region21: #{tpu_custom_call.1} parent=1 // pred_fallthru
      _
    // Predicated region
    $region22: #{tpu_custom_call.1} parent=1 // pred_check
      _
    $region23: #{tpu_custom_call.1} parent=1 // pred_check_branch
      %55 = sbr.rel (0) target = $region25
    $region24: #{tpu_custom_call.1} parent=1 // pred_region
      _
    $region25: #{tpu_custom_call.1} parent=1 // pred_fallthru
      _
    // Predicated region
    $region26: #{tpu_custom_call.1} parent=1 // pred_check
      _
    $region27: #{tpu_custom_call.1} parent=1 // pred_check_branch
      %57 = sbr.rel (0) target = $region29
    $region28: #{tpu_custom_call.1} parent=1 // pred_region
      _
    $region29: #{tpu_custom_call.1} parent=1 // pred_fallthru
      _
    // Predicated region
    $region30: #{tpu_custom_call.1} parent=1 // pred_check
      _
    $region31: #{tpu_custom_call.1} parent=1 // pred_check_branch
      %59 = sbr.rel (0) target = $region33
    $region32: #{tpu_custom_call.1} parent=1 // pred_region
      %60 = dma.done [#allocation4], 512
    $region33: #{tpu_custom_call.1} parent=1 // pred_fallthru
      _
    // Predicated region
    $region34: #{tpu_custom_call.1} parent=1 // pred_check
      _
    $region35: #{tpu_custom_call.1} parent=1 // pred_check_branch
      %62 = sbr.rel (0) target = $region37
    $region36: #{tpu_custom_call.1} parent=1 // pred_region
      %63 = dma.done [#allocation6], 8192
    $region37: #{tpu_custom_call.1} parent=1 // pred_fallthru
      _
    // Predicated region
    $region38: #{tpu_custom_call.1} parent=1 // pred_check
      _
    $region39: #{tpu_custom_call.1} parent=1 // pred_check_branch
      %65 = sbr.rel (0) target = $region41
    $region40: #{tpu_custom_call.1} parent=1 // pred_region
      %66 = dma.done [#allocation6], 1024
    $region41: #{tpu_custom_call.1} parent=1 // pred_fallthru
      _
    %v68 = vld [vmem:[#allocation3] sm:$0xff]
    %v69 = vld [vmem:[#allocation3 + $0x8] sm:$0xff]
    %v70 = vld [vmem:[#allocation3 + $0x10] sm:$0xff]
    %v71 = vld [vmem:[#allocation3 + $0x18] sm:$0xff]
    %v72 = vld [vmem:[#allocation5] sm:$0xf]
    %v73 = vld [vmem:[#allocation5 + $0x4] sm:$0xf]
    %v74 = vld [vmem:[#allocation5 + $0x8] sm:$0xf]
    %v75 = vld [vmem:[#allocation5 + $0xc] sm:$0xf]
    %v76 = vld [vmem:[#allocation5 + $0x10] sm:$0xf]
    %v77 = vld [vmem:[#allocation5 + $0x14] sm:$0xf]
    %v78 = vld [vmem:[#allocation5 + $0x18] sm:$0xf]
    %v79 = vld [vmem:[#allocation5 + $0x1c] sm:$0xf]
    %v80 = vld [vmem:[#allocation5 + $0x20] sm:$0xf]
    %v81 = vld [vmem:[#allocation5 + $0x24] sm:$0xf]
    %v82 = vld [vmem:[#allocation5 + $0x28] sm:$0xf]
    %v83 = vld [vmem:[#allocation5 + $0x2c] sm:$0xf]
    %v84 = vld [vmem:[#allocation5 + $0x30] sm:$0xf]
    %v85 = vld [vmem:[#allocation5 + $0x34] sm:$0xf]
    %v86 = vld [vmem:[#allocation5 + $0x38] sm:$0xf]
    %v87 = vld [vmem:[#allocation5 + $0x3c] sm:$0xf]
    %v88 = vld [vmem:[#allocation5 + $0x40] sm:$0xf]
    %v89 = vld [vmem:[#allocation5 + $0x44] sm:$0xf]
    %v90 = vld [vmem:[#allocation5 + $0x48] sm:$0xf]
    %v91 = vld [vmem:[#allocation5 + $0x4c] sm:$0xf]
    %v92 = vld [vmem:[#allocation5 + $0x50] sm:$0xf]
    %v93 = vld [vmem:[#allocation5 + $0x54] sm:$0xf]
    %v94 = vld [vmem:[#allocation5 + $0x58] sm:$0xf]
    %v95 = vld [vmem:[#allocation5 + $0x5c] sm:$0xf]
    %v96 = vld [vmem:[#allocation5 + $0x60] sm:$0xf]
    %v97 = vld [vmem:[#allocation5 + $0x64] sm:$0xf]
    %v98 = vld [vmem:[#allocation5 + $0x68] sm:$0xf]
    %v99 = vld [vmem:[#allocation5 + $0x6c] sm:$0xf]
    %v100 = vld [vmem:[#allocation5 + $0x70] sm:$0xf]
    %v101 = vld [vmem:[#allocation5 + $0x74] sm:$0xf]
    %v102 = vld [vmem:[#allocation5 + $0x78] sm:$0xf]
    %v103 = vld [vmem:[#allocation5 + $0x7c] sm:$0xf]
    %v104 = vld [vmem:[#allocation5 + $0x80] sm:$0xf]
    %v105 = vld [vmem:[#allocation5 + $0x84] sm:$0xf]
    %v106 = vld [vmem:[#allocation5 + $0x88] sm:$0xf]
    %v107 = vld [vmem:[#allocation5 + $0x8c] sm:$0xf]
    %v108 = vld [vmem:[#allocation5 + $0x90] sm:$0xf]
    %v109 = vld [vmem:[#allocation5 + $0x94] sm:$0xf]
    %v110 = vld [vmem:[#allocation5 + $0x98] sm:$0xf]
    %v111 = vld [vmem:[#allocation5 + $0x9c] sm:$0xf]
    %v112 = vld [vmem:[#allocation5 + $0xa0] sm:$0xf]
    %v113 = vld [vmem:[#allocation5 + $0xa4] sm:$0xf]
    %v114 = vld [vmem:[#allocation5 + $0xa8] sm:$0xf]
    %v115 = vld [vmem:[#allocation5 + $0xac] sm:$0xf]
    %v116 = vld [vmem:[#allocation5 + $0xb0] sm:$0xf]
    %v117 = vld [vmem:[#allocation5 + $0xb4] sm:$0xf]
    %v118 = vld [vmem:[#allocation5 + $0xb8] sm:$0xf]
    %v119 = vld [vmem:[#allocation5 + $0xbc] sm:$0xf]
    %v120 = vld [vmem:[#allocation5 + $0xc0] sm:$0xf]
    %v121 = vld [vmem:[#allocation5 + $0xc4] sm:$0xf]
    %v122 = vld [vmem:[#allocation5 + $0xc8] sm:$0xf]
    %v123 = vld [vmem:[#allocation5 + $0xcc] sm:$0xf]
    %v124 = vld [vmem:[#allocation5 + $0xd0] sm:$0xf]
    %v125 = vld [vmem:[#allocation5 + $0xd4] sm:$0xf]
    %v126 = vld [vmem:[#allocation5 + $0xd8] sm:$0xf]
    %v127 = vld [vmem:[#allocation5 + $0xdc] sm:$0xf]
    %v128 = vld [vmem:[#allocation5 + $0xe0] sm:$0xf]
    %v129 = vld [vmem:[#allocation5 + $0xe4] sm:$0xf]
    %v130 = vld [vmem:[#allocation5 + $0xe8] sm:$0xf]
    %v131 = vld [vmem:[#allocation5 + $0xec] sm:$0xf]
    %v132 = vld [vmem:[#allocation5 + $0xf0] sm:$0xf]
    %v133 = vld [vmem:[#allocation5 + $0xf4] sm:$0xf]
    %v134 = vld [vmem:[#allocation5 + $0xf8] sm:$0xf]
    %v135 = vld [vmem:[#allocation5 + $0xfc] sm:$0xf]
    %v136 = vld [vmem:[#allocation5 + $0x100] sm:$0xf]
    %v137 = vld [vmem:[#allocation5 + $0x104] sm:$0xf]
    %v138 = vld [vmem:[#allocation5 + $0x108] sm:$0xf]
    %v139 = vld [vmem:[#allocation5 + $0x10c] sm:$0xf]
    %v140 = vld [vmem:[#allocation5 + $0x110] sm:$0xf]
    %v141 = vld [vmem:[#allocation5 + $0x114] sm:$0xf]
    %v142 = vld [vmem:[#allocation5 + $0x118] sm:$0xf]
    %v143 = vld [vmem:[#allocation5 + $0x11c] sm:$0xf]
    %v144 = vld [vmem:[#allocation5 + $0x120] sm:$0xf]
    %v145 = vld [vmem:[#allocation5 + $0x124] sm:$0xf]
    %v146 = vld [vmem:[#allocation5 + $0x128] sm:$0xf]
    %v147 = vld [vmem:[#allocation5 + $0x12c] sm:$0xf]
    %v148 = vld [vmem:[#allocation5 + $0x130] sm:$0xf]
    %v149 = vld [vmem:[#allocation5 + $0x134] sm:$0xf]
    %v150 = vld [vmem:[#allocation5 + $0x138] sm:$0xf]
    %v151 = vld [vmem:[#allocation5 + $0x13c] sm:$0xf]
    %v152 = vld [vmem:[#allocation5 + $0x140] sm:$0xf]
    %v153 = vld [vmem:[#allocation5 + $0x144] sm:$0xf]
    %v154 = vld [vmem:[#allocation5 + $0x148] sm:$0xf]
    %v155 = vld [vmem:[#allocation5 + $0x14c] sm:$0xf]
    %v156 = vld [vmem:[#allocation5 + $0x150] sm:$0xf]
    %v157 = vld [vmem:[#allocation5 + $0x154] sm:$0xf]
    %v158 = vld [vmem:[#allocation5 + $0x158] sm:$0xf]
    %v159 = vld [vmem:[#allocation5 + $0x15c] sm:$0xf]
    %v160 = vld [vmem:[#allocation5 + $0x160] sm:$0xf]
    %v161 = vld [vmem:[#allocation5 + $0x164] sm:$0xf]
    %v162 = vld [vmem:[#allocation5 + $0x168] sm:$0xf]
    %v163 = vld [vmem:[#allocation5 + $0x16c] sm:$0xf]
    %v164 = vld [vmem:[#allocation5 + $0x170] sm:$0xf]
    %v165 = vld [vmem:[#allocation5 + $0x174] sm:$0xf]
    %v166 = vld [vmem:[#allocation5 + $0x178] sm:$0xf]
    %v167 = vld [vmem:[#allocation5 + $0x17c] sm:$0xf]
    %v168 = vld [vmem:[#allocation5 + $0x180] sm:$0xf]
    %v169 = vld [vmem:[#allocation5 + $0x184] sm:$0xf]
    %v170 = vld [vmem:[#allocation5 + $0x188] sm:$0xf]
    %v171 = vld [vmem:[#allocation5 + $0x18c] sm:$0xf]
    %v172 = vld [vmem:[#allocation5 + $0x190] sm:$0xf]
    %v173 = vld [vmem:[#allocation5 + $0x194] sm:$0xf]
    %v174 = vld [vmem:[#allocation5 + $0x198] sm:$0xf]
    %v175 = vld [vmem:[#allocation5 + $0x19c] sm:$0xf]
    %v176 = vld [vmem:[#allocation5 + $0x1a0] sm:$0xf]
    %v177 = vld [vmem:[#allocation5 + $0x1a4] sm:$0xf]
    %v178 = vld [vmem:[#allocation5 + $0x1a8] sm:$0xf]
    %v179 = vld [vmem:[#allocation5 + $0x1ac] sm:$0xf]
    %v180 = vld [vmem:[#allocation5 + $0x1b0] sm:$0xf]
    %v181 = vld [vmem:[#allocation5 + $0x1b4] sm:$0xf]
    %v182 = vld [vmem:[#allocation5 + $0x1b8] sm:$0xf]
    %v183 = vld [vmem:[#allocation5 + $0x1bc] sm:$0xf]
    %v184 = vld [vmem:[#allocation5 + $0x1c0] sm:$0xf]
    %v185 = vld [vmem:[#allocation5 + $0x1c4] sm:$0xf]
    %v186 = vld [vmem:[#allocation5 + $0x1c8] sm:$0xf]
    %v187 = vld [vmem:[#allocation5 + $0x1cc] sm:$0xf]
    %v188 = vld [vmem:[#allocation5 + $0x1d0] sm:$0xf]
    %v189 = vld [vmem:[#allocation5 + $0x1d4] sm:$0xf]
    %v190 = vld [vmem:[#allocation5 + $0x1d8] sm:$0xf]
    %v191 = vld [vmem:[#allocation5 + $0x1dc] sm:$0xf]
    %v192 = vld [vmem:[#allocation5 + $0x1e0] sm:$0xf]
    %v193 = vld [vmem:[#allocation5 + $0x1e4] sm:$0xf]
    %v194 = vld [vmem:[#allocation5 + $0x1e8] sm:$0xf]
    %v195 = vld [vmem:[#allocation5 + $0x1ec] sm:$0xf]
    %v196 = vld [vmem:[#allocation5 + $0x1f0] sm:$0xf]
    %v197 = vld [vmem:[#allocation5 + $0x1f4] sm:$0xf]
    %v198 = vld [vmem:[#allocation5 + $0x1f8] sm:$0xf]
    %v199 = vld [vmem:[#allocation5 + $0x1fc] sm:$0xf]
    %v200 = vld [vmem:[%s2] sm:$0x1]
    %v202 = vlaneseq
    %v203 = vshrl.u32 %v202, 7
    %v204 = vsub.s32 0, %v203
    %v205 = vrot.slane %v200, %v204
    %v211 = vunpack.c.l.b16 %v68
    %v212 = vunpack.c.h.b16 %v68
    %v213 = vunpack.c.l.b16 %v69
    %v214 = vunpack.c.h.b16 %v69
    %v215 = vunpack.c.l.b16 %v70
    %v216 = vunpack.c.h.b16 %v70
    %v217 = vunpack.c.l.b16 %v71
    %v218 = vunpack.c.h.b16 %v71
    %v219 = vpack.c.b16 %v211, %v211
    %v220 = vpack.c.b16 %v212, %v212
    %v221 = vpack.c.b16 %v213, %v213
    %v222 = vpack.c.b16 %v214, %v214
    %v223 = vpack.c.b16 %v215, %v215
    %v224 = vpack.c.b16 %v216, %v216
    %v225 = vpack.c.b16 %v217, %v217
    %v226 = vpack.c.b16 %v218, %v218
    %v363 = vunpack.c.l.b16 %v72
    %v364 = vunpack.c.l.b16 %v73
    %v365 = vunpack.c.l.b16 %v74
    %v366 = vunpack.c.l.b16 %v75
    %v367 = vunpack.c.l.b16 %v76
    %v368 = vunpack.c.l.b16 %v77
    %v369 = vunpack.c.l.b16 %v78
    %v370 = vunpack.c.l.b16 %v79
    %v371 = vunpack.c.l.b16 %v80
    %v372 = vunpack.c.l.b16 %v81
    %v373 = vunpack.c.l.b16 %v82
    %v374 = vunpack.c.l.b16 %v83
    %v375 = vunpack.c.l.b16 %v84
    %v376 = vunpack.c.l.b16 %v85
    %v377 = vunpack.c.l.b16 %v86
    %v378 = vunpack.c.l.b16 %v87
    %v379 = vunpack.c.l.b16 %v88
    %v380 = vunpack.c.l.b16 %v89
    %v381 = vunpack.c.l.b16 %v90
    %v382 = vunpack.c.l.b16 %v91
    %v383 = vunpack.c.l.b16 %v92
    %v384 = vunpack.c.l.b16 %v93
    %v385 = vunpack.c.l.b16 %v94
    %v386 = vunpack.c.l.b16 %v95
    %v387 = vunpack.c.l.b16 %v96
    %v388 = vunpack.c.l.b16 %v97
    %v389 = vunpack.c.l.b16 %v98
    %v390 = vunpack.c.l.b16 %v99
    %v391 = vunpack.c.l.b16 %v100
    %v392 = vunpack.c.l.b16 %v101
    %v393 = vunpack.c.l.b16 %v102
    %v394 = vunpack.c.l.b16 %v103
    %v395 = vunpack.c.l.b16 %v104
    %v396 = vunpack.c.l.b16 %v105
    %v397 = vunpack.c.l.b16 %v106
    %v398 = vunpack.c.l.b16 %v107
    %v399 = vunpack.c.l.b16 %v108
    %v400 = vunpack.c.l.b16 %v109
    %v401 = vunpack.c.l.b16 %v110
    %v402 = vunpack.c.l.b16 %v111
    %v403 = vunpack.c.l.b16 %v112
    %v404 = vunpack.c.l.b16 %v113
    %v405 = vunpack.c.l.b16 %v114
    %v406 = vunpack.c.l.b16 %v115
    %v407 = vunpack.c.l.b16 %v116
    %v408 = vunpack.c.l.b16 %v117
    %v409 = vunpack.c.l.b16 %v118
    %v410 = vunpack.c.l.b16 %v119
    %v411 = vunpack.c.l.b16 %v120
    %v412 = vunpack.c.l.b16 %v121
    %v413 = vunpack.c.l.b16 %v122
    %v414 = vunpack.c.l.b16 %v123
    %v415 = vunpack.c.l.b16 %v124
    %v416 = vunpack.c.l.b16 %v125
    %v417 = vunpack.c.l.b16 %v126
    %v418 = vunpack.c.l.b16 %v127
    %v419 = vunpack.c.l.b16 %v128
    %v420 = vunpack.c.l.b16 %v129
    %v421 = vunpack.c.l.b16 %v130
    %v422 = vunpack.c.l.b16 %v131
    %v423 = vunpack.c.l.b16 %v132
    %v424 = vunpack.c.l.b16 %v133
    %v425 = vunpack.c.l.b16 %v134
    %v426 = vunpack.c.l.b16 %v135
    %v427 = vunpack.c.l.b16 %v136
    %v428 = vunpack.c.l.b16 %v137
    %v429 = vunpack.c.l.b16 %v138
    %v430 = vunpack.c.l.b16 %v139
    %v431 = vunpack.c.l.b16 %v140
    %v432 = vunpack.c.l.b16 %v141
    %v433 = vunpack.c.l.b16 %v142
    %v434 = vunpack.c.l.b16 %v143
    %v435 = vunpack.c.l.b16 %v144
    %v436 = vunpack.c.l.b16 %v145
    %v437 = vunpack.c.l.b16 %v146
    %v438 = vunpack.c.l.b16 %v147
    %v439 = vunpack.c.l.b16 %v148
    %v440 = vunpack.c.l.b16 %v149
    %v441 = vunpack.c.l.b16 %v150
    %v442 = vunpack.c.l.b16 %v151
    %v443 = vunpack.c.l.b16 %v152
    %v444 = vunpack.c.l.b16 %v153
    %v445 = vunpack.c.l.b16 %v154
    %v446 = vunpack.c.l.b16 %v155
    %v447 = vunpack.c.l.b16 %v156
    %v448 = vunpack.c.l.b16 %v157
    %v449 = vunpack.c.l.b16 %v158
    %v450 = vunpack.c.l.b16 %v159
    %v451 = vunpack.c.l.b16 %v160
    %v452 = vunpack.c.l.b16 %v161
    %v453 = vunpack.c.l.b16 %v162
    %v454 = vunpack.c.l.b16 %v163
    %v455 = vunpack.c.l.b16 %v164
    %v456 = vunpack.c.l.b16 %v165
    %v457 = vunpack.c.l.b16 %v166
    %v458 = vunpack.c.l.b16 %v167
    %v459 = vunpack.c.l.b16 %v168
    %v460 = vunpack.c.l.b16 %v169
    %v461 = vunpack.c.l.b16 %v170
    %v462 = vunpack.c.l.b16 %v171
    %v463 = vunpack.c.l.b16 %v172
    %v464 = vunpack.c.l.b16 %v173
    %v465 = vunpack.c.l.b16 %v174
    %v466 = vunpack.c.l.b16 %v175
    %v467 = vunpack.c.l.b16 %v176
    %v468 = vunpack.c.l.b16 %v177
    %v469 = vunpack.c.l.b16 %v178
    %v470 = vunpack.c.l.b16 %v179
    %v471 = vunpack.c.l.b16 %v180
    %v472 = vunpack.c.l.b16 %v181
    %v473 = vunpack.c.l.b16 %v182
    %v474 = vunpack.c.l.b16 %v183
    %v475 = vunpack.c.l.b16 %v184
    %v476 = vunpack.c.l.b16 %v185
    %v477 = vunpack.c.l.b16 %v186
    %v478 = vunpack.c.l.b16 %v187
    %v479 = vunpack.c.l.b16 %v188
    %v480 = vunpack.c.l.b16 %v189
    %v481 = vunpack.c.l.b16 %v190
    %v482 = vunpack.c.l.b16 %v191
    %v483 = vunpack.c.l.b16 %v192
    %v484 = vunpack.c.l.b16 %v193
    %v485 = vunpack.c.l.b16 %v194
    %v486 = vunpack.c.l.b16 %v195
    %v487 = vunpack.c.l.b16 %v196
    %v488 = vunpack.c.l.b16 %v197
    %v489 = vunpack.c.l.b16 %v198
    %v490 = vunpack.c.l.b16 %v199
    %v491 = vpack.c.b16 %v364, %v363
    %v492 = vpack.c.b16 %v366, %v365
    %v493 = vpack.c.b16 %v368, %v367
    %v494 = vpack.c.b16 %v370, %v369
    %v495 = vpack.c.b16 %v372, %v371
    %v496 = vpack.c.b16 %v374, %v373
    %v497 = vpack.c.b16 %v376, %v375
    %v498 = vpack.c.b16 %v378, %v377
    %v499 = vpack.c.b16 %v380, %v379
    %v500 = vpack.c.b16 %v382, %v381
    %v501 = vpack.c.b16 %v384, %v383
    %v502 = vpack.c.b16 %v386, %v385
    %v503 = vpack.c.b16 %v388, %v387
    %v504 = vpack.c.b16 %v390, %v389
    %v505 = vpack.c.b16 %v392, %v391
    %v506 = vpack.c.b16 %v394, %v393
    %v507 = vpack.c.b16 %v396, %v395
    %v508 = vpack.c.b16 %v398, %v397
    %v509 = vpack.c.b16 %v400, %v399
    %v510 = vpack.c.b16 %v402, %v401
    %v511 = vpack.c.b16 %v404, %v403
    %v512 = vpack.c.b16 %v406, %v405
    %v513 = vpack.c.b16 %v408, %v407
    %v514 = vpack.c.b16 %v410, %v409
    %v515 = vpack.c.b16 %v412, %v411
    %v516 = vpack.c.b16 %v414, %v413
    %v517 = vpack.c.b16 %v416, %v415
    %v518 = vpack.c.b16 %v418, %v417
    %v519 = vpack.c.b16 %v420, %v419
    %v520 = vpack.c.b16 %v422, %v421
    %v521 = vpack.c.b16 %v424, %v423
    %v522 = vpack.c.b16 %v426, %v425
    %v523 = vpack.c.b16 %v428, %v427
    %v524 = vpack.c.b16 %v430, %v429
    %v525 = vpack.c.b16 %v432, %v431
    %v526 = vpack.c.b16 %v434, %v433
    %v527 = vpack.c.b16 %v436, %v435
    %v528 = vpack.c.b16 %v438, %v437
    %v529 = vpack.c.b16 %v440, %v439
    %v530 = vpack.c.b16 %v442, %v441
    %v531 = vpack.c.b16 %v444, %v443
    %v532 = vpack.c.b16 %v446, %v445
    %v533 = vpack.c.b16 %v448, %v447
    %v534 = vpack.c.b16 %v450, %v449
    %v535 = vpack.c.b16 %v452, %v451
    %v536 = vpack.c.b16 %v454, %v453
    %v537 = vpack.c.b16 %v456, %v455
    %v538 = vpack.c.b16 %v458, %v457
    %v539 = vpack.c.b16 %v460, %v459
    %v540 = vpack.c.b16 %v462, %v461
    %v541 = vpack.c.b16 %v464, %v463
    %v542 = vpack.c.b16 %v466, %v465
    %v543 = vpack.c.b16 %v468, %v467
    %v544 = vpack.c.b16 %v470, %v469
    %v545 = vpack.c.b16 %v472, %v471
    %v546 = vpack.c.b16 %v474, %v473
    %v547 = vpack.c.b16 %v476, %v475
    %v548 = vpack.c.b16 %v478, %v477
    %v549 = vpack.c.b16 %v480, %v479
    %v550 = vpack.c.b16 %v482, %v481
    %v551 = vpack.c.b16 %v484, %v483
    %v552 = vpack.c.b16 %v486, %v485
    %v553 = vpack.c.b16 %v488, %v487
    %v554 = vpack.c.b16 %v490, %v489
    %619 = vmatprep.subr.bf16.mxu0 0
    %620 = vmatpush1.bf16.msra.mxu0 %v498
    %621 = vmatprep.subr.bf16.mxu0 0
    %622 = vmatpush1.bf16.msra.mxu0 %v497
    %623 = vmatprep.subr.bf16.mxu0 0
    %624 = vmatpush1.bf16.msra.mxu0 %v496
    %625 = vmatprep.subr.bf16.mxu0 0
    %626 = vmatpush1.bf16.msra.mxu0 %v495
    %627 = vmatprep.subr.bf16.mxu0 0
    %628 = vmatpush1.bf16.msra.mxu0 %v494
    %629 = vmatprep.subr.bf16.mxu0 0
    %630 = vmatpush1.bf16.msra.mxu0 %v493
    %631 = vmatprep.subr.bf16.mxu0 0
    %632 = vmatpush1.bf16.msra.mxu0 %v492
    %633 = vmatprep.subr.bf16.mxu0 0
    %634 = vmatpush1.bf16.msra.mxu0 %v491
    %635 = vmatprep.subr.bf16.mxu0 0
    %636 = vmatpush2.bf16.msra.mxu0 %v506
    %637 = vmatprep.subr.bf16.mxu0 0
    %638 = vmatpush2.bf16.msra.mxu0 %v505
    %639 = vmatprep.subr.bf16.mxu0 0
    %640 = vmatpush2.bf16.msra.mxu0 %v504
    %641 = vmatprep.subr.bf16.mxu0 0
    %642 = vmatpush2.bf16.msra.mxu0 %v503
    %643 = vmatprep.subr.bf16.mxu0 0
    %644 = vmatpush2.bf16.msra.mxu0 %v502
    %645 = vmatprep.subr.bf16.mxu0 0
    %646 = vmatpush2.bf16.msra.mxu0 %v501
    %647 = vmatprep.subr.bf16.mxu0 0
    %648 = vmatpush2.bf16.msra.mxu0 %v500
    %649 = vmatprep.subr.bf16.mxu0 0
    %650 = vmatpush2.bf16.msra.mxu0 %v499
    %651 = vmatprep.mubr.bf16.mxu0 %v220
    %652 = vmatmul.mubr.bf16.gmra.mxu0 %v219
    %v653 = vpop.f32.mrf.mxu0
    %v654 = vadd.f32 %v205, %v653
    %v655 = vpop.f32.mrf.mxu0
    %v656 = vpop.f32.mrf.mxu0
    %v657 = vpop.f32.mrf.mxu0
    %658 = vdwg.mxu0
    %659 = vmatprep.subr.bf16.mxu0 0
    %660 = vmatpush1.bf16.msra.mxu0 %v514
    %661 = vmatprep.subr.bf16.mxu0 0
    %662 = vmatpush1.bf16.msra.mxu0 %v513
    %663 = vmatprep.subr.bf16.mxu0 0
    %664 = vmatpush1.bf16.msra.mxu0 %v512
    %665 = vmatprep.subr.bf16.mxu0 0
    %666 = vmatpush1.bf16.msra.mxu0 %v511
    %667 = vmatprep.subr.bf16.mxu0 0
    %668 = vmatpush1.bf16.msra.mxu0 %v510
    %669 = vmatprep.subr.bf16.mxu0 0
    %670 = vmatpush1.bf16.msra.mxu0 %v509
    %671 = vmatprep.subr.bf16.mxu0 0
    %672 = vmatpush1.bf16.msra.mxu0 %v508
    %673 = vmatprep.subr.bf16.mxu0 0
    %674 = vmatpush1.bf16.msra.mxu0 %v507
    %675 = vmatprep.subr.bf16.mxu0 0
    %676 = vmatpush2.bf16.msra.mxu0 %v522
    %677 = vmatprep.subr.bf16.mxu0 0
    %678 = vmatpush2.bf16.msra.mxu0 %v521
    %679 = vmatprep.subr.bf16.mxu0 0
    %680 = vmatpush2.bf16.msra.mxu0 %v520
    %681 = vmatprep.subr.bf16.mxu0 0
    %682 = vmatpush2.bf16.msra.mxu0 %v519
    %683 = vmatprep.subr.bf16.mxu0 0
    %684 = vmatpush2.bf16.msra.mxu0 %v518
    %685 = vmatprep.subr.bf16.mxu0 0
    %686 = vmatpush2.bf16.msra.mxu0 %v517
    %687 = vmatprep.subr.bf16.mxu0 0
    %688 = vmatpush2.bf16.msra.mxu0 %v516
    %689 = vmatprep.subr.bf16.mxu0 0
    %690 = vmatpush2.bf16.msra.mxu0 %v515
    %691 = vmatprep.mubr.bf16.mxu0 %v222
    %692 = vmatmul.mubr.bf16.gmra.mxu0 %v221
    %v693 = vpop.f32.mrf.mxu0
    %v694 = vadd.f32 %v654, %v693
    %v695 = vpop.f32.mrf.mxu0
    %v696 = vpop.f32.mrf.mxu0
    %v697 = vpop.f32.mrf.mxu0
    %698 = vdwg.mxu0
    %699 = vmatprep.subr.bf16.mxu0 0
    %700 = vmatpush1.bf16.msra.mxu0 %v530
    %701 = vmatprep.subr.bf16.mxu0 0
    %702 = vmatpush1.bf16.msra.mxu0 %v529
    %703 = vmatprep.subr.bf16.mxu0 0
    %704 = vmatpush1.bf16.msra.mxu0 %v528
    %705 = vmatprep.subr.bf16.mxu0 0
    %706 = vmatpush1.bf16.msra.mxu0 %v527
    %707 = vmatprep.subr.bf16.mxu0 0
    %708 = vmatpush1.bf16.msra.mxu0 %v526
    %709 = vmatprep.subr.bf16.mxu0 0
    %710 = vmatpush1.bf16.msra.mxu0 %v525
    %711 = vmatprep.subr.bf16.mxu0 0
    %712 = vmatpush1.bf16.msra.mxu0 %v524
    %713 = vmatprep.subr.bf16.mxu0 0
    %714 = vmatpush1.bf16.msra.mxu0 %v523
    %715 = vmatprep.subr.bf16.mxu0 0
    %716 = vmatpush2.bf16.msra.mxu0 %v538
    %717 = vmatprep.subr.bf16.mxu0 0
    %718 = vmatpush2.bf16.msra.mxu0 %v537
    %719 = vmatprep.subr.bf16.mxu0 0
    %720 = vmatpush2.bf16.msra.mxu0 %v536
    %721 = vmatprep.subr.bf16.mxu0 0
    %722 = vmatpush2.bf16.msra.mxu0 %v535
    %723 = vmatprep.subr.bf16.mxu0 0
    %724 = vmatpush2.bf16.msra.mxu0 %v534
    %725 = vmatprep.subr.bf16.mxu0 0
    %726 = vmatpush2.bf16.msra.mxu0 %v533
    %727 = vmatprep.subr.bf16.mxu0 0
    %728 = vmatpush2.bf16.msra.mxu0 %v532
    %729 = vmatprep.subr.bf16.mxu0 0
    %730 = vmatpush2.bf16.msra.mxu0 %v531
    %731 = vmatprep.mubr.bf16.mxu0 %v224
    %732 = vmatmul.mubr.bf16.gmra.mxu0 %v223
    %v733 = vpop.f32.mrf.mxu0
    %v734 = vadd.f32 %v694, %v733
    %v735 = vpop.f32.mrf.mxu0
    %v736 = vpop.f32.mrf.mxu0
    %v737 = vpop.f32.mrf.mxu0
    %738 = vdwg.mxu0
    %739 = vmatprep.subr.bf16.mxu0 0
    %740 = vmatpush1.bf16.msra.mxu0 %v546
    %741 = vmatprep.subr.bf16.mxu0 0
    %742 = vmatpush1.bf16.msra.mxu0 %v545
    %743 = vmatprep.subr.bf16.mxu0 0
    %744 = vmatpush1.bf16.msra.mxu0 %v544
    %745 = vmatprep.subr.bf16.mxu0 0
    %746 = vmatpush1.bf16.msra.mxu0 %v543
    %747 = vmatprep.subr.bf16.mxu0 0
    %748 = vmatpush1.bf16.msra.mxu0 %v542
    %749 = vmatprep.subr.bf16.mxu0 0
    %750 = vmatpush1.bf16.msra.mxu0 %v541
    %751 = vmatprep.subr.bf16.mxu0 0
    %752 = vmatpush1.bf16.msra.mxu0 %v540
    %753 = vmatprep.subr.bf16.mxu0 0
    %754 = vmatpush1.bf16.msra.mxu0 %v539
    %755 = vmatprep.subr.bf16.mxu0 0
    %756 = vmatpush2.bf16.msra.mxu0 %v554
    %757 = vmatprep.subr.bf16.mxu0 0
    %758 = vmatpush2.bf16.msra.mxu0 %v553
    %759 = vmatprep.subr.bf16.mxu0 0
    %760 = vmatpush2.bf16.msra.mxu0 %v552
    %761 = vmatprep.subr.bf16.mxu0 0
    %762 = vmatpush2.bf16.msra.mxu0 %v551
    %763 = vmatprep.subr.bf16.mxu0 0
    %764 = vmatpush2.bf16.msra.mxu0 %v550
    %765 = vmatprep.subr.bf16.mxu0 0
    %766 = vmatpush2.bf16.msra.mxu0 %v549
    %767 = vmatprep.subr.bf16.mxu0 0
    %768 = vmatpush2.bf16.msra.mxu0 %v548
    %769 = vmatprep.subr.bf16.mxu0 0
    %770 = vmatpush2.bf16.msra.mxu0 %v547
    %771 = vmatprep.mubr.bf16.mxu0 %v226
    %772 = vmatmul.mubr.bf16.gmra.mxu0 %v225
    %v773 = vpop.f32.mrf.mxu0
    %v774 = vadd.f32 %v734, %v773
    %v775 = vpop.f32.mrf.mxu0
    %v776 = vpop.f32.mrf.mxu0
    %v777 = vpop.f32.mrf.mxu0
    %778 = vdwg.mxu0
    %v779 = vmax.f32 %v774, 0.0
    %v780 = vpack.c.bf16 %v779, %v779
    %v781 = vld [vmem:[#allocation7] sm:$0xf]
    %v782 = vld [vmem:[#allocation7 + $0x4] sm:$0xf]
    %v783 = vld [vmem:[#allocation7 + $0x8] sm:$0xf]
    %v784 = vld [vmem:[#allocation7 + $0xc] sm:$0xf]
    %v785 = vld [vmem:[#allocation7 + $0x10] sm:$0xf]
    %v786 = vld [vmem:[#allocation7 + $0x14] sm:$0xf]
    %v787 = vld [vmem:[#allocation7 + $0x18] sm:$0xf]
    %v788 = vld [vmem:[#allocation7 + $0x1c] sm:$0xf]
    %v789 = vld [vmem:[#allocation7 + $0x20] sm:$0xf]
    %v790 = vld [vmem:[#allocation7 + $0x24] sm:$0xf]
    %v791 = vld [vmem:[#allocation7 + $0x28] sm:$0xf]
    %v792 = vld [vmem:[#allocation7 + $0x2c] sm:$0xf]
    %v793 = vld [vmem:[#allocation7 + $0x30] sm:$0xf]
    %v794 = vld [vmem:[#allocation7 + $0x34] sm:$0xf]
    %v795 = vld [vmem:[#allocation7 + $0x38] sm:$0xf]
    %v796 = vld [vmem:[#allocation7 + $0x3c] sm:$0xf]
    %v797 = vld [vmem:[%s4] sm:$0x1]
    %v799 = vlaneseq
    %v800 = vshrl.u32 %v799, 7
    %v801 = vsub.s32 0, %v800
    %v802 = vrot.slane %v797, %v801
    %v820 = vunpack.c.l.b16 %v781
    %v821 = vunpack.c.l.b16 %v782
    %v822 = vunpack.c.l.b16 %v783
    %v823 = vunpack.c.l.b16 %v784
    %v824 = vunpack.c.l.b16 %v785
    %v825 = vunpack.c.l.b16 %v786
    %v826 = vunpack.c.l.b16 %v787
    %v827 = vunpack.c.l.b16 %v788
    %v828 = vunpack.c.l.b16 %v789
    %v829 = vunpack.c.l.b16 %v790
    %v830 = vunpack.c.l.b16 %v791
    %v831 = vunpack.c.l.b16 %v792
    %v832 = vunpack.c.l.b16 %v793
    %v833 = vunpack.c.l.b16 %v794
    %v834 = vunpack.c.l.b16 %v795
    %v835 = vunpack.c.l.b16 %v796
    %v836 = vpack.c.b16 %v821, %v820
    %v837 = vpack.c.b16 %v823, %v822
    %v838 = vpack.c.b16 %v825, %v824
    %v839 = vpack.c.b16 %v827, %v826
    %v840 = vpack.c.b16 %v829, %v828
    %v841 = vpack.c.b16 %v831, %v830
    %v842 = vpack.c.b16 %v833, %v832
    %v843 = vpack.c.b16 %v835, %v834
    %852 = vmatprep.subr.bf16.mxu0 0
    %853 = vmatpush1.bf16.msra.mxu0 %v843
    %854 = vmatprep.subr.bf16.mxu0 0
    %855 = vmatpush1.bf16.msra.mxu0 %v842
    %856 = vmatprep.subr.bf16.mxu0 0
    %857 = vmatpush1.bf16.msra.mxu0 %v841
    %858 = vmatprep.subr.bf16.mxu0 0
    %859 = vmatpush1.bf16.msra.mxu0 %v840
    %860 = vmatprep.subr.bf16.mxu0 0
    %861 = vmatpush1.bf16.msra.mxu0 %v839
    %862 = vmatprep.subr.bf16.mxu0 0
    %863 = vmatpush1.bf16.msra.mxu0 %v838
    %864 = vmatprep.subr.bf16.mxu0 0
    %865 = vmatpush1.bf16.msra.mxu0 %v837
    %866 = vmatprep.subr.bf16.mxu0 0
    %867 = vmatpush1.bf16.msra.mxu0 %v836
    %868 = vmatprep.subr.bf16.mxu0 0
    %869 = vmatpush2.bf16.msra.mxu0 0
    %870 = vmatprep.subr.bf16.mxu0 0
    %871 = vmatpush2.bf16.msra.mxu0 0
    %872 = vmatprep.subr.bf16.mxu0 0
    %873 = vmatpush2.bf16.msra.mxu0 0
    %874 = vmatprep.subr.bf16.mxu0 0
    %875 = vmatpush2.bf16.msra.mxu0 0
    %876 = vmatprep.subr.bf16.mxu0 0
    %877 = vmatpush2.bf16.msra.mxu0 0
    %878 = vmatprep.subr.bf16.mxu0 0
    %879 = vmatpush2.bf16.msra.mxu0 0
    %880 = vmatprep.subr.bf16.mxu0 0
    %881 = vmatpush2.bf16.msra.mxu0 0
    %882 = vmatprep.subr.bf16.mxu0 0
    %883 = vmatpush2.bf16.msra.mxu0 0
    %884 = vmatprep.mubr.bf16.mxu0 0
    %885 = vmatmul.mubr.bf16.gmra.mxu0 %v780
    %v886 = vpop.f32.mrf.mxu0
    %v887 = vadd.f32 %v802, %v886
    %v888 = vpop.f32.mrf.mxu0
    %v889 = vpop.f32.mrf.mxu0
    %v890 = vpop.f32.mrf.mxu0
    %891 = vdwg.mxu0
    %v892 = vmax.f32 %v887, 0.0
    %v893 = vld [vmem:[%s5] sm:$0x1]
    %v895 = vlaneseq
    %v896 = vshrl.u32 %v895, 7
    %v897 = vsub.s32 0, %v896
    %v898 = vrot.slane %v893, %v897
    %v900 = vmul.f32 %v892, %v898
    %901 = vadd.xlane.f32.xlu0 %v900
    %v902 = vpop.xlane.xlu0 %901
    %v903 = vld [vmem:[#allocation2] sm:$0x1]
    %v905 = vlaneseq
    %v906 = vshrl.u32 %v905, 7
    %v907 = vsub.s32 0, %v906
    %v908 = vrot.slane %v903, %v907
    %v910 = vadd.f32 %v902, %v908
    %vm911 = vcmask 7168
    %912 = vst.msk [vmem:[%s7] sm:$0xff] %vm911, %v910
    // Predicated region
    $region42: #{tpu_custom_call.1} parent=1 // pred_check
      _
    $region43: #{tpu_custom_call.1} parent=1 // pred_check_branch
      %914 = sbr.rel (0) target = $region45
    $region44: #{tpu_custom_call.1} parent=1 // pred_region
      _
    $region45: #{tpu_custom_call.1} parent=1 // pred_fallthru
      _
    // Predicated region
    $region46: #{tpu_custom_call.1} parent=1 // pred_check
      _
    $region47: #{tpu_custom_call.1} parent=1 // pred_check_branch
      %916 = sbr.rel (0) target = $region49
    $region48: #{tpu_custom_call.1} parent=1 // pred_region
      _
    $region49: #{tpu_custom_call.1} parent=1 // pred_fallthru
      _
    %917 = vsyncpa [#allocation4], 1
    %918 = vsyncpa [#allocation6], 1

</llo_original>
